<compile_context>
chip_gen: v5e
topology: v5e:2x2
jax: 0.10.0
libtpu: 0.0.40
codegen_flags: <defaults>
</compile_context>

<pallas_src>
import jax
import jax.numpy as jnp
from jax.experimental import pallas as pl
from jax.experimental.pallas import tpu as pltpu

# ----------------------------- config -----------------------------
EMBED_SIZE = 128        # config.embed_size (lane-aligned)
D_FF = 256              # config.d_ff       (lane-aligned)
MAX_TOKEN_TILE = 512    # max tokens per grid step
MIN_SPLIT_TILE = 256    # once tokens >= 2*this, keep >= 2 grid steps (v7x: 2 TCs)


# ----------------------------- kernel -----------------------------
def feedforward_kernel(x_ref, w1_ref, b1_ref, w2_ref, b2_ref, o_ref):
    # x_ref : VMEM bf16 [TM, E]
    # w1_ref: VMEM bf16 [E, D_FF]    (pre-transposed vs. PyTorch [out,in] layout)
    # b1_ref: VMEM f32  [1, D_FF]
    # w2_ref: VMEM bf16 [D_FF, E]    (pre-transposed vs. PyTorch [out,in] layout)
    # b2_ref: VMEM f32  [1, E]
    # o_ref : VMEM f32  [TM, E]
    # bf16 operands -> f32 accumulation on the MXU.
    h = jnp.dot(x_ref[...], w1_ref[...], preferred_element_type=jnp.float32)
    h = jnp.maximum(h + b1_ref[...], 0.0)          # f32 epilogue; dropout = identity (eval)
    h = h.astype(jnp.bfloat16)                     # feed the second MXU pass in bf16
    y = jnp.dot(h, w2_ref[...], preferred_element_type=jnp.float32) + b2_ref[...]
    o_ref[...] = y.astype(o_ref.dtype)


# ----------------------------- tiling -----------------------------
def _pick_token_tile(n_aligned):
    """Pick the token tile. n_aligned is the token count rounded up to a multiple of 16."""
    if n_aligned < 2 * MIN_SPLIT_TILE:
        # Small problem: one tile covering everything (block == full array), no padding.
        return n_aligned
    # Large problem: largest tile in [MIN_SPLIT_TILE, MAX_TOKEN_TILE] that divides the
    # token count exactly (no padded tail) while keeping >= 2 grid steps (v7x dual-TC).
    hi = min(MAX_TOKEN_TILE, (n_aligned // 2) // 16 * 16)
    for tm in range(hi, MIN_SPLIT_TILE - 1, -16):
        if n_aligned % tm == 0:
            return tm
    return MIN_SPLIT_TILE  # fall back: bounded (<256-row) padded tail, still >= 2 steps


# ----------------------------- wrapper -----------------------------
def feedforward_forward(x, w1, b1, w2, b2):
    """x: f32 [B, S, E]; w1: [E, D_FF]; b1: [D_FF]; w2: [D_FF, E]; b2: [E] -> f32 [B, S, E]."""
    B, S, E = x.shape
    assert E == EMBED_SIZE
    n_tok = B * S

    n_aligned = ((n_tok + 15) // 16) * 16
    tm = _pick_token_tile(n_aligned)
    n_pad = ((n_aligned + tm - 1) // tm) * tm

    x_flat = x.reshape(n_tok, E)
    if n_pad != n_tok:
        # Only materializes a padded copy when the token count is not a tile multiple.
        x_flat = jnp.pad(x_flat, ((0, n_pad - n_tok), (0, 0)))
    x_flat = x_flat.astype(jnp.bfloat16)

    w1_b = w1.astype(jnp.bfloat16)
    w2_b = w2.astype(jnp.bfloat16)
    b1_2d = b1.reshape(1, D_FF).astype(jnp.float32)
    b2_2d = b2.reshape(1, E).astype(jnp.float32)

    grid = (n_pad // tm,)

    cost = pl.CostEstimate(
        flops=4 * n_pad * E * D_FF,                       # two matmuls, 2*M*K*N each
        transcendentals=0,
        bytes_accessed=(n_pad * E * 2                     # x   (bf16)
                        + E * D_FF * 2 + D_FF * E * 2     # W1, W2 (bf16)
                        + D_FF * 4 + E * 4                # biases (f32)
                        + n_pad * E * 4),                 # output (f32)
    )

    out_flat = pl.pallas_call(
        feedforward_kernel,
        grid=grid,
        in_specs=[
            pl.BlockSpec((tm, E), lambda i: (i, 0)),                                   # x tile
            pl.BlockSpec((E, D_FF), lambda i: (0, 0), pipeline_mode=pl.Buffered(1)),   # W1
            pl.BlockSpec((1, D_FF), lambda i: (0, 0), pipeline_mode=pl.Buffered(1)),   # b1
            pl.BlockSpec((D_FF, E), lambda i: (0, 0), pipeline_mode=pl.Buffered(1)),   # W2
            pl.BlockSpec((1, E), lambda i: (0, 0), pipeline_mode=pl.Buffered(1)),      # b2
        ],
        out_specs=pl.BlockSpec((tm, E), lambda i: (i, 0)),
        out_shape=jax.ShapeDtypeStruct((n_pad, E), jnp.float32),
        compiler_params=pltpu.CompilerParams(
            dimension_semantics=("parallel",)),            # independent token tiles
        cost_estimate=cost,
    )(x_flat, w1_b, b1_2d, w2_b, b2_2d)

    if n_pad != n_tok:
        out_flat = out_flat[:n_tok]
    return out_flat.reshape(B, S, E)


# ----------------------------- params -----------------------------
def init_params(key):
    # nn.Linear default init: U(-1/sqrt(fan_in), 1/sqrt(fan_in)) for weight & bias.
    k1, k2, k3, k4 = jax.random.split(key, 4)
    lim1 = 1.0 / (EMBED_SIZE ** 0.5)
    lim2 = 1.0 / (D_FF ** 0.5)
    # Stored pre-transposed relative to PyTorch ([out, in] -> [in, out]).
    w1 = jax.random.uniform(k1, (EMBED_SIZE, D_FF), jnp.float32, -lim1, lim1)
    b1 = jax.random.uniform(k2, (D_FF,), jnp.float32, -lim1, lim1)
    w2 = jax.random.uniform(k3, (D_FF, EMBED_SIZE), jnp.float32, -lim2, lim2)
    b2 = jax.random.uniform(k4, (EMBED_SIZE,), jnp.float32, -lim2, lim2)
    return w1, b1, w2, b2


# ----------------------------- main -----------------------------
if __name__ == "__main__":
    key = jax.random.PRNGKey(0)
    k_params, k_x = jax.random.split(key)

    w1, b1, w2, b2 = init_params(k_params)

    B, S = 2, 8
    x = jax.random.normal(k_x, (B, S, EMBED_SIZE), dtype=jnp.float32)

    out = feedforward_forward(x, w1, b1, w2, b2)
    out = jax.block_until_ready(out)
    assert out.shape == (B, S, EMBED_SIZE)

    # Reference 1: emulate the kernel's bf16-operand / f32-accumulate path (tight check).
    xb = x.reshape(-1, EMBED_SIZE).astype(jnp.bfloat16).astype(jnp.float32)
    w1b = w1.astype(jnp.bfloat16).astype(jnp.float32)
    w2b = w2.astype(jnp.bfloat16).astype(jnp.float32)
    h_b = jnp.maximum(xb @ w1b + b1, 0.0)
    h_b = h_b.astype(jnp.bfloat16).astype(jnp.float32)
    ref_bf16 = (h_b @ w2b + b2).reshape(B, S, EMBED_SIZE)
    assert jnp.allclose(out, ref_bf16, atol=1e-3, rtol=1e-3), "mismatch vs bf16-emulated reference"

    # Reference 2: pure-f32 PyTorch-equivalent FeedForward (loose tolerance for bf16 inputs).
    h_f = jnp.maximum(x.reshape(-1, EMBED_SIZE) @ w1 + b1, 0.0)
    ref_f32 = (h_f @ w2 + b2).reshape(B, S, EMBED_SIZE)
    assert jnp.allclose(out, ref_f32, atol=3e-2, rtol=3e-2), "mismatch vs f32 reference FeedForward"

    print("KERNEL_OK")
</pallas_src>

<mosaic_0001>
module attributes {stable_mosaic.version = 11 : i64} {
  func.func @feedforward_kernel(%arg0: i32, %arg1: memref<16x128xbf16, #tpu.memory_space<vmem>>, %arg2: memref<128x256xbf16, #tpu.memory_space<vmem>>, %arg3: memref<1x256xf32, #tpu.memory_space<vmem>>, %arg4: memref<256x128xbf16, #tpu.memory_space<vmem>>, %arg5: memref<1x128xf32, #tpu.memory_space<vmem>>, %arg6: memref<16x128xf32, #tpu.memory_space<vmem>>) attributes {dimension_semantics = [#tpu.dimension_semantics<parallel>], iteration_bounds = array<i64: 1>, scalar_prefetch = 0 : i64, scratch_operands = 0 : i64, tpu.core_type = #tpu.core_type<tc>, window_params = [{transform_indices = @transform_0, window_bounds = array<i64: 16, 128>}, {pipeline_mode = #tpu.pipeline_mode<synchronous>, transform_indices = @transform_1, window_bounds = array<i64: 128, 256>}, {pipeline_mode = #tpu.pipeline_mode<synchronous>, transform_indices = @transform_2, window_bounds = array<i64: 1, 256>}, {pipeline_mode = #tpu.pipeline_mode<synchronous>, transform_indices = @transform_3, window_bounds = array<i64: 256, 128>}, {pipeline_mode = #tpu.pipeline_mode<synchronous>, transform_indices = @transform_4, window_bounds = array<i64: 1, 128>}, {transform_indices = @transform_5, window_bounds = array<i64: 16, 128>}]} {
    %c0 = arith.constant 0 : index
    %c0_0 = arith.constant 0 : index
    %0 = vector.load %arg1[%c0, %c0_0] : memref<16x128xbf16, #tpu.memory_space<vmem>>, vector<16x128xbf16>
    %c0_1 = arith.constant 0 : index
    %c0_2 = arith.constant 0 : index
    %1 = vector.load %arg2[%c0_1, %c0_2] : memref<128x256xbf16, #tpu.memory_space<vmem>>, vector<128x256xbf16>
    %cst = arith.constant dense<0.000000e+00> : vector<16x256xf32>
    %2 = tpu.matmul %0, %1, %cst {dimension_numbers = #tpu.dot_dimension_numbers<[1], [0], [0], [1], [0, 0, 1, 1], [], []>} : vector<16x128xbf16>, vector<128x256xbf16>, vector<16x256xf32> -> vector<16x256xf32>
    %c0_3 = arith.constant 0 : index
    %c0_4 = arith.constant 0 : index
    %3 = vector.load %arg3[%c0_3, %c0_4] : memref<1x256xf32, #tpu.memory_space<vmem>>, vector<1x256xf32>
    %4 = vector.broadcast %3 : vector<1x256xf32> to vector<16x256xf32>
    %5 = arith.addf %2, %4 : vector<16x256xf32>
    %cst_5 = arith.constant 0.000000e+00 : f32
    %6 = vector.broadcast %cst_5 : f32 to vector<16x256xf32>
    %7 = arith.maximumf %5, %6 : vector<16x256xf32>
    %8 = arith.truncf %7 : vector<16x256xf32> to vector<16x256xbf16>
    %c0_6 = arith.constant 0 : index
    %c0_7 = arith.constant 0 : index
    %9 = vector.load %arg4[%c0_6, %c0_7] : memref<256x128xbf16, #tpu.memory_space<vmem>>, vector<256x128xbf16>
    %cst_8 = arith.constant dense<0.000000e+00> : vector<16x128xf32>
    %10 = tpu.matmul %8, %9, %cst_8 {dimension_numbers = #tpu.dot_dimension_numbers<[1], [0], [0], [1], [0, 0, 1, 1], [], []>} : vector<16x256xbf16>, vector<256x128xbf16>, vector<16x128xf32> -> vector<16x128xf32>
    %c0_9 = arith.constant 0 : index
    %c0_10 = arith.constant 0 : index
    %11 = vector.load %arg5[%c0_9, %c0_10] : memref<1x128xf32, #tpu.memory_space<vmem>>, vector<1x128xf32>
    %12 = vector.broadcast %11 : vector<1x128xf32> to vector<16x128xf32>
    %13 = arith.addf %10, %12 : vector<16x128xf32>
    %c0_11 = arith.constant 0 : index
    %c0_12 = arith.constant 0 : index
    %14 = vector.load %arg6[%c0_11, %c0_12] : memref<16x128xf32, #tpu.memory_space<vmem>>, vector<16x128xf32>
    tpu.vector_store %arg6[%c0_11, %c0_12], %13 {strides = array<i32>} : memref<16x128xf32, #tpu.memory_space<vmem>>, vector<16x128xf32>,
    return
  }
  func.func @transform_0(%arg0: i32) -> (i32, i32) {
    %c0_i32 = arith.constant 0 : i32
    %c0_i32_0 = arith.constant 0 : i32
    return %arg0, %c0_i32 : i32, i32
  }
  func.func @transform_1(%arg0: i32) -> (i32, i32) {
    %c0_i32 = arith.constant 0 : i32
    %c0_i32_0 = arith.constant 0 : i32
    %c0_i32_1 = arith.constant 0 : i32
    return %c0_i32, %c0_i32_0 : i32, i32
  }
  func.func @transform_2(%arg0: i32) -> (i32, i32) {
    %c0_i32 = arith.constant 0 : i32
    %c0_i32_0 = arith.constant 0 : i32
    %c0_i32_1 = arith.constant 0 : i32
    return %c0_i32, %c0_i32_0 : i32, i32
  }
  func.func @transform_3(%arg0: i32) -> (i32, i32) {
    %c0_i32 = arith.constant 0 : i32
    %c0_i32_0 = arith.constant 0 : i32
    %c0_i32_1 = arith.constant 0 : i32
    return %c0_i32, %c0_i32_0 : i32, i32
  }
  func.func @transform_4(%arg0: i32) -> (i32, i32) {
    %c0_i32 = arith.constant 0 : i32
    %c0_i32_0 = arith.constant 0 : i32
    %c0_i32_1 = arith.constant 0 : i32
    return %c0_i32, %c0_i32_0 : i32, i32
  }
  func.func @transform_5(%arg0: i32) -> (i32, i32) {
    %c0_i32 = arith.constant 0 : i32
    %c0_i32_0 = arith.constant 0 : i32
    return %arg0, %c0_i32 : i32, i32
  }
}

</mosaic_0001>

<llo_original>
// kernel: tpu_custom_call.1
$region0: #{tpu_custom_call.1}
  #allocation0 [shape = 'u32[]', space=smem, size = 0x4, offset = 0x4, fixed_abs, tag = 'smem constant byte address 0x4 - core index']
  #allocation1 [shape = 'u32[72,128]{1,0:T(1,128)}', space=vmem, size = 0x9000, scoped, tag = 'internal scratch']
  %s0 = inlined_call_operand.hbm [shape: bf16[16,128], index: 0, kind: input, shape index: {}]
  %s1 = inlined_call_operand.hbm [shape: bf16[128,256], index: 1, kind: input, shape index: {}]
  %s2 = inlined_call_operand.hbm [shape: f32[1,256], index: 2, kind: input, shape index: {}]
  %s3 = inlined_call_operand.hbm [shape: bf16[256,128], index: 3, kind: input, shape index: {}]
  %s4 = inlined_call_operand.vmem [shape: f32[1,128], index: 4, kind: input, shape index: {}]
  %s5 = inlined_call_operand.hbm [shape: f32[16,128], index: 5, kind: output, shape index: {}]
  %s6 = sld [smem:[#allocation0]]
  $region46: #{tpu_custom_call.1} parent=0
    _
  %s8 = ssub.s32 1, %s6
  %s9 = scalar_select 0, %s8, %s6
  $region1: #{tpu_custom_call.1} parent=0
    #allocation2 [shape = 'u8[4096]{0}', space=vmem, size = 0x1000, scoped, tag = 'input window, operand 0, single buffered']
    #allocation3 [shape = 's32[1]{0}', space=sflag, size = 0x4, scoped, tag = 'scoped memory for tpu_custom_call.1']
    #allocation4 [shape = 's32[1]{0}', space=sflag, size = 0x4, scoped, tag = 'scoped memory for tpu_custom_call.1']
    #allocation5 [shape = 'u8[65536]{0}', space=vmem, size = 0x10000, scoped, tag = 'input window, operand 1, single buffered']
    #allocation6 [shape = 's32[1]{0}', space=sflag, size = 0x4, scoped, tag = 'scoped memory for tpu_custom_call.1']
    #allocation7 [shape = 'u8[1024]{0}', space=vmem, size = 0x400, scoped, tag = 'input window, operand 2, single buffered']
    #allocation8 [shape = 'u8[65536]{0}', space=vmem, size = 0x10000, scoped, tag = 'input window, operand 3, single buffered']
    #allocation9 [shape = 's32[1]{0}', space=sflag, size = 0x4, scoped, tag = 'scoped memory for tpu_custom_call.1']
    #allocation10 [shape = 'u8[8192]{0}', space=vmem, size = 0x2000, scoped, tag = 'output window, operand 0, single buffered']
    %10 = vsyncpa [#allocation3], 0
    %11 = vsyncpa [#allocation6], 0
    %12 = vsyncpa [#allocation9], 0
    %13 = vsyncpa [#allocation4], 0
    // Predicated region
    $region2: #{tpu_custom_call.1} parent=1 // pred_check
      _
    $region3: #{tpu_custom_call.1} parent=1 // pred_check_branch
      %15 = sbr.rel (0) target = $region5
    $region4: #{tpu_custom_call.1} parent=1 // pred_region
      %17 = vsyncadd [#allocation3], 0
      %s18 = sshll.u32 %s0, 4
      %s19 = int_to_ptr.hbm [resolvable:$true] %s18
      %s20 = sshll.u32 [#allocation2], 4
      %s21 = int_to_ptr.vmem [resolvable:$true] %s20
      %26 = dma.hbm_to_vmem [thread:$0]  %s19, 128, %s21, [#allocation3], 64, 64, 4
    $region5: #{tpu_custom_call.1} parent=1 // pred_fallthru
      _
    // Predicated region
    $region6: #{tpu_custom_call.1} parent=1 // pred_check
      _
    $region7: #{tpu_custom_call.1} parent=1 // pred_check_branch
      %28 = sbr.rel (0) target = $region9
    $region8: #{tpu_custom_call.1} parent=1 // pred_region
      %30 = vsyncadd [#allocation6], 0
      %s31 = sshll.u32 %s1, 4
      %s32 = int_to_ptr.hbm [resolvable:$true] %s31
      %s33 = sshll.u32 [#allocation5], 4
      %s34 = int_to_ptr.vmem [resolvable:$true] %s33
      %39 = dma.hbm_to_vmem [thread:$0]  %s32, 2048, %s34, [#allocation6], 128, 128, 8
    $region9: #{tpu_custom_call.1} parent=1 // pred_fallthru
      _
    // Predicated region
    $region10: #{tpu_custom_call.1} parent=1 // pred_check
      _
    $region11: #{tpu_custom_call.1} parent=1 // pred_check_branch
      %41 = sbr.rel (0) target = $region13
    $region12: #{tpu_custom_call.1} parent=1 // pred_region
      %43 = vsyncadd [#allocation6], 0
      %s45 = sshll.u32 %s2, 4
      %s46 = int_to_ptr.hbm [resolvable:$true] %s45
      %s47 = sshll.u32 [#allocation7], 4
      %s48 = int_to_ptr.vmem [resolvable:$true] %s47
      %50 = dma.hbm_to_vmem [thread:$0]  %s46, 32, %s48, [#allocation6]
    $region13: #{tpu_custom_call.1} parent=1 // pred_fallthru
      _
    // Predicated region
    $region14: #{tpu_custom_call.1} parent=1 // pred_check
      _
    $region15: #{tpu_custom_call.1} parent=1 // pred_check_branch
      %52 = sbr.rel (0) target = $region17
    $region16: #{tpu_custom_call.1} parent=1 // pred_region
      %54 = vsyncadd [#allocation9], 0
      %s55 = sshll.u32 %s3, 4
      %s56 = int_to_ptr.hbm [resolvable:$true] %s55
      %s57 = sshll.u32 [#allocation8], 4
      %s58 = int_to_ptr.vmem [resolvable:$true] %s57
      %63 = dma.hbm_to_vmem [thread:$0]  %s56, 2048, %s58, [#allocation9], 64, 64, 4
    $region17: #{tpu_custom_call.1} parent=1 // pred_fallthru
      _
    // Predicated region
    $region18: #{tpu_custom_call.1} parent=1 // pred_check
      _
    $region19: #{tpu_custom_call.1} parent=1 // pred_check_branch
      %65 = sbr.rel (0) target = $region21
    $region20: #{tpu_custom_call.1} parent=1 // pred_region
      _
    $region21: #{tpu_custom_call.1} parent=1 // pred_fallthru
      _
    // Predicated region
    $region22: #{tpu_custom_call.1} parent=1 // pred_check
      _
    $region23: #{tpu_custom_call.1} parent=1 // pred_check_branch
      %67 = sbr.rel (0) target = $region25
    $region24: #{tpu_custom_call.1} parent=1 // pred_region
      %69 = dma.done [#allocation3], 128
    $region25: #{tpu_custom_call.1} parent=1 // pred_fallthru
      _
    // Predicated region
    $region26: #{tpu_custom_call.1} parent=1 // pred_check
      _
    $region27: #{tpu_custom_call.1} parent=1 // pred_check_branch
      %71 = sbr.rel (0) target = $region29
    $region28: #{tpu_custom_call.1} parent=1 // pred_region
      %73 = dma.done [#allocation6], 2048
    $region29: #{tpu_custom_call.1} parent=1 // pred_fallthru
      _
    // Predicated region
    $region30: #{tpu_custom_call.1} parent=1 // pred_check
      _
    $region31: #{tpu_custom_call.1} parent=1 // pred_check_branch
      %75 = sbr.rel (0) target = $region33
    $region32: #{tpu_custom_call.1} parent=1 // pred_region
      %77 = dma.done [#allocation6], 32
    $region33: #{tpu_custom_call.1} parent=1 // pred_fallthru
      _
    // Predicated region
    $region34: #{tpu_custom_call.1} parent=1 // pred_check
      _
    $region35: #{tpu_custom_call.1} parent=1 // pred_check_branch
      %79 = sbr.rel (0) target = $region37
    $region36: #{tpu_custom_call.1} parent=1 // pred_region
      %81 = dma.done [#allocation9], 2048
    $region37: #{tpu_custom_call.1} parent=1 // pred_fallthru
      _
    %v82 = vld [vmem:[#allocation2] sm:$0xf]
    %v83 = vld [vmem:[#allocation2 + $0x4] sm:$0xf]
    %v84 = vld [vmem:[#allocation5] sm:$0xff]
    %v85 = vld [vmem:[#allocation5 + $0x8] sm:$0xff]
    %v86 = vld [vmem:[#allocation5 + $0x10] sm:$0xff]
    %v87 = vld [vmem:[#allocation5 + $0x18] sm:$0xff]
    %v88 = vld [vmem:[#allocation5 + $0x20] sm:$0xff]
    %v89 = vld [vmem:[#allocation5 + $0x28] sm:$0xff]
    %v90 = vld [vmem:[#allocation5 + $0x30] sm:$0xff]
    %v91 = vld [vmem:[#allocation5 + $0x38] sm:$0xff]
    %v92 = vld [vmem:[#allocation5 + $0x40] sm:$0xff]
    %v93 = vld [vmem:[#allocation5 + $0x48] sm:$0xff]
    %v94 = vld [vmem:[#allocation5 + $0x50] sm:$0xff]
    %v95 = vld [vmem:[#allocation5 + $0x58] sm:$0xff]
    %v96 = vld [vmem:[#allocation5 + $0x60] sm:$0xff]
    %v97 = vld [vmem:[#allocation5 + $0x68] sm:$0xff]
    %v98 = vld [vmem:[#allocation5 + $0x70] sm:$0xff]
    %v99 = vld [vmem:[#allocation5 + $0x78] sm:$0xff]
    %v100 = vld [vmem:[#allocation7] sm:$0x3]
    %v102 = vperm.slane %v100, 0
    %v103 = vperm.slane %v100, 1
    %v108 = vunpack.c.l.b16 %v82
    %v109 = vunpack.c.l.b16 %v83
    %v110 = vpack.c.b16 %v109, %v108
    %v128 = vunpack.c.l.b16 %v84
    %v129 = vunpack.c.h.b16 %v84
    %v130 = vunpack.c.l.b16 %v85
    %v131 = vunpack.c.h.b16 %v85
    %v132 = vunpack.c.l.b16 %v86
    %v133 = vunpack.c.h.b16 %v86
    %v134 = vunpack.c.l.b16 %v87
    %v135 = vunpack.c.h.b16 %v87
    %v136 = vunpack.c.l.b16 %v88
    %v137 = vunpack.c.h.b16 %v88
    %v138 = vunpack.c.l.b16 %v89
    %v139 = vunpack.c.h.b16 %v89
    %v140 = vunpack.c.l.b16 %v90
    %v141 = vunpack.c.h.b16 %v90
    %v142 = vunpack.c.l.b16 %v91
    %v143 = vunpack.c.h.b16 %v91
    %v144 = vunpack.c.l.b16 %v92
    %v145 = vunpack.c.h.b16 %v92
    %v146 = vunpack.c.l.b16 %v93
    %v147 = vunpack.c.h.b16 %v93
    %v148 = vunpack.c.l.b16 %v94
    %v149 = vunpack.c.h.b16 %v94
    %v150 = vunpack.c.l.b16 %v95
    %v151 = vunpack.c.h.b16 %v95
    %v152 = vunpack.c.l.b16 %v96
    %v153 = vunpack.c.h.b16 %v96
    %v154 = vunpack.c.l.b16 %v97
    %v155 = vunpack.c.h.b16 %v97
    %v156 = vunpack.c.l.b16 %v98
    %v157 = vunpack.c.h.b16 %v98
    %v158 = vunpack.c.l.b16 %v99
    %v159 = vunpack.c.h.b16 %v99
    %v160 = vpack.c.b16 %v130, %v128
    %v161 = vpack.c.b16 %v131, %v129
    %v162 = vpack.c.b16 %v134, %v132
    %v163 = vpack.c.b16 %v135, %v133
    %v164 = vpack.c.b16 %v138, %v136
    %v165 = vpack.c.b16 %v139, %v137
    %v166 = vpack.c.b16 %v142, %v140
    %v167 = vpack.c.b16 %v143, %v141
    %v168 = vpack.c.b16 %v146, %v144
    %v169 = vpack.c.b16 %v147, %v145
    %v170 = vpack.c.b16 %v150, %v148
    %v171 = vpack.c.b16 %v151, %v149
    %v172 = vpack.c.b16 %v154, %v152
    %v173 = vpack.c.b16 %v155, %v153
    %v174 = vpack.c.b16 %v158, %v156
    %v175 = vpack.c.b16 %v159, %v157
    %192 = vmatpush.bf16.msra.mxu0 %v174
    %193 = vmatpush.bf16.msra.mxu0 %v172
    %194 = vmatpush.bf16.msra.mxu0 %v170
    %195 = vmatpush.bf16.msra.mxu0 %v168
    %196 = vmatpush.bf16.msra.mxu0 %v166
    %197 = vmatpush.bf16.msra.mxu0 %v164
    %198 = vmatpush.bf16.msra.mxu0 %v162
    %199 = vmatpush.bf16.msra.mxu0 %v160
    %200 = vmatmul.bf16.gmra.mxu0 %v110
    %v201 = vpop.f32.mrf.mxu0
    %v202 = vadd.f32 %v102, %v201
    %v203 = vpop.f32.mrf.mxu0
    %v204 = vadd.f32 %v102, %v203
    %205 = vdwg.mxu0
    %206 = vmatpush.bf16.msra.mxu0 %v175
    %207 = vmatpush.bf16.msra.mxu0 %v173
    %208 = vmatpush.bf16.msra.mxu0 %v171
    %209 = vmatpush.bf16.msra.mxu0 %v169
    %210 = vmatpush.bf16.msra.mxu0 %v167
    %211 = vmatpush.bf16.msra.mxu0 %v165
    %212 = vmatpush.bf16.msra.mxu0 %v163
    %213 = vmatpush.bf16.msra.mxu0 %v161
    %214 = vmatmul.bf16.gmra.mxu0 %v110
    %v215 = vpop.f32.mrf.mxu0
    %v216 = vadd.f32 %v103, %v215
    %v217 = vpop.f32.mrf.mxu0
    %v218 = vadd.f32 %v103, %v217
    %219 = vdwg.mxu0
    %v220 = vmax.f32 %v202, 0.0
    %v221 = vmax.f32 %v216, 0.0
    %v222 = vmax.f32 %v204, 0.0
    %v223 = vmax.f32 %v218, 0.0
    %v224 = vpack.c.bf16 %v222, %v220
    %v225 = vpack.c.bf16 %v223, %v221
    %v226 = vld [vmem:[#allocation8] sm:$0xf]
    %v227 = vld [vmem:[#allocation8 + $0x4] sm:$0xf]
    %v228 = vld [vmem:[#allocation8 + $0x8] sm:$0xf]
    %v229 = vld [vmem:[#allocation8 + $0xc] sm:$0xf]
    %v230 = vld [vmem:[#allocation8 + $0x10] sm:$0xf]
    %v231 = vld [vmem:[#allocation8 + $0x14] sm:$0xf]
    %v232 = vld [vmem:[#allocation8 + $0x18] sm:$0xf]
    %v233 = vld [vmem:[#allocation8 + $0x1c] sm:$0xf]
    %v234 = vld [vmem:[#allocation8 + $0x20] sm:$0xf]
    %v235 = vld [vmem:[#allocation8 + $0x24] sm:$0xf]
    %v236 = vld [vmem:[#allocation8 + $0x28] sm:$0xf]
    %v237 = vld [vmem:[#allocation8 + $0x2c] sm:$0xf]
    %v238 = vld [vmem:[#allocation8 + $0x30] sm:$0xf]
    %v239 = vld [vmem:[#allocation8 + $0x34] sm:$0xf]
    %v240 = vld [vmem:[#allocation8 + $0x38] sm:$0xf]
    %v241 = vld [vmem:[#allocation8 + $0x3c] sm:$0xf]
    %v242 = vld [vmem:[#allocation8 + $0x40] sm:$0xf]
    %v243 = vld [vmem:[#allocation8 + $0x44] sm:$0xf]
    %v244 = vld [vmem:[#allocation8 + $0x48] sm:$0xf]
    %v245 = vld [vmem:[#allocation8 + $0x4c] sm:$0xf]
    %v246 = vld [vmem:[#allocation8 + $0x50] sm:$0xf]
    %v247 = vld [vmem:[#allocation8 + $0x54] sm:$0xf]
    %v248 = vld [vmem:[#allocation8 + $0x58] sm:$0xf]
    %v249 = vld [vmem:[#allocation8 + $0x5c] sm:$0xf]
    %v250 = vld [vmem:[#allocation8 + $0x60] sm:$0xf]
    %v251 = vld [vmem:[#allocation8 + $0x64] sm:$0xf]
    %v252 = vld [vmem:[#allocation8 + $0x68] sm:$0xf]
    %v253 = vld [vmem:[#allocation8 + $0x6c] sm:$0xf]
    %v254 = vld [vmem:[#allocation8 + $0x70] sm:$0xf]
    %v255 = vld [vmem:[#allocation8 + $0x74] sm:$0xf]
    %v256 = vld [vmem:[#allocation8 + $0x78] sm:$0xf]
    %v257 = vld [vmem:[#allocation8 + $0x7c] sm:$0xf]
    %v258 = vld [vmem:[%s4] sm:$0x1]
    %v260 = vperm.slane %v258, 0
    %v294 = vunpack.c.l.b16 %v226
    %v295 = vunpack.c.l.b16 %v227
    %v296 = vunpack.c.l.b16 %v228
    %v297 = vunpack.c.l.b16 %v229
    %v298 = vunpack.c.l.b16 %v230
    %v299 = vunpack.c.l.b16 %v231
    %v300 = vunpack.c.l.b16 %v232
    %v301 = vunpack.c.l.b16 %v233
    %v302 = vunpack.c.l.b16 %v234
    %v303 = vunpack.c.l.b16 %v235
    %v304 = vunpack.c.l.b16 %v236
    %v305 = vunpack.c.l.b16 %v237
    %v306 = vunpack.c.l.b16 %v238
    %v307 = vunpack.c.l.b16 %v239
    %v308 = vunpack.c.l.b16 %v240
    %v309 = vunpack.c.l.b16 %v241
    %v310 = vunpack.c.l.b16 %v242
    %v311 = vunpack.c.l.b16 %v243
    %v312 = vunpack.c.l.b16 %v244
    %v313 = vunpack.c.l.b16 %v245
    %v314 = vunpack.c.l.b16 %v246
    %v315 = vunpack.c.l.b16 %v247
    %v316 = vunpack.c.l.b16 %v248
    %v317 = vunpack.c.l.b16 %v249
    %v318 = vunpack.c.l.b16 %v250
    %v319 = vunpack.c.l.b16 %v251
    %v320 = vunpack.c.l.b16 %v252
    %v321 = vunpack.c.l.b16 %v253
    %v322 = vunpack.c.l.b16 %v254
    %v323 = vunpack.c.l.b16 %v255
    %v324 = vunpack.c.l.b16 %v256
    %v325 = vunpack.c.l.b16 %v257
    %v326 = vpack.c.b16 %v295, %v294
    %v327 = vpack.c.b16 %v297, %v296
    %v328 = vpack.c.b16 %v299, %v298
    %v329 = vpack.c.b16 %v301, %v300
    %v330 = vpack.c.b16 %v303, %v302
    %v331 = vpack.c.b16 %v305, %v304
    %v332 = vpack.c.b16 %v307, %v306
    %v333 = vpack.c.b16 %v309, %v308
    %v334 = vpack.c.b16 %v311, %v310
    %v335 = vpack.c.b16 %v313, %v312
    %v336 = vpack.c.b16 %v315, %v314
    %v337 = vpack.c.b16 %v317, %v316
    %v338 = vpack.c.b16 %v319, %v318
    %v339 = vpack.c.b16 %v321, %v320
    %v340 = vpack.c.b16 %v323, %v322
    %v341 = vpack.c.b16 %v325, %v324
    %358 = vmatpush.bf16.msra.mxu0 %v333
    %359 = vmatpush.bf16.msra.mxu0 %v332
    %360 = vmatpush.bf16.msra.mxu0 %v331
    %361 = vmatpush.bf16.msra.mxu0 %v330
    %362 = vmatpush.bf16.msra.mxu0 %v329
    %363 = vmatpush.bf16.msra.mxu0 %v328
    %364 = vmatpush.bf16.msra.mxu0 %v327
    %365 = vmatpush.bf16.msra.mxu0 %v326
    %366 = vmatmul.bf16.gmra.mxu0 %v224
    %v367 = vpop.f32.mrf.mxu0
    %v368 = vadd.f32 %v260, %v367
    %v369 = vpop.f32.mrf.mxu0
    %v370 = vadd.f32 %v260, %v369
    %371 = vdwg.mxu0
    %372 = vmatpush.bf16.msra.mxu0 %v341
    %373 = vmatpush.bf16.msra.mxu0 %v340
    %374 = vmatpush.bf16.msra.mxu0 %v339
    %375 = vmatpush.bf16.msra.mxu0 %v338
    %376 = vmatpush.bf16.msra.mxu0 %v337
    %377 = vmatpush.bf16.msra.mxu0 %v336
    %378 = vmatpush.bf16.msra.mxu0 %v335
    %379 = vmatpush.bf16.msra.mxu0 %v334
    %380 = vmatmul.bf16.gmra.mxu0 %v225
    %v381 = vpop.f32.mrf.mxu0
    %v382 = vadd.f32 %v368, %v381
    %v383 = vpop.f32.mrf.mxu0
    %v384 = vadd.f32 %v370, %v383
    %385 = vdwg.mxu0
    %386 = vst [vmem:[#allocation10] sm:$0xff] %v382
    %387 = vst [vmem:[#allocation10 + $0x8] sm:$0xff] %v384
    // Predicated region
    $region38: #{tpu_custom_call.1} parent=1 // pred_check
      _
    $region39: #{tpu_custom_call.1} parent=1 // pred_check_branch
      %389 = sbr.rel (0) target = $region41
    $region40: #{tpu_custom_call.1} parent=1 // pred_region
      %391 = vsyncadd [#allocation4], 0
      %s392 = sshll.u32 [#allocation10], 4
      %s393 = int_to_ptr.vmem [resolvable:$true] %s392
      %s394 = sshll.u32 %s5, 4
      %s395 = int_to_ptr.hbm [resolvable:$true] %s394
      %400 = dma.vmem_to_hbm [thread:$0]  %s393, 256, %s395, [#allocation4], 128, 128, 8
    $region41: #{tpu_custom_call.1} parent=1 // pred_fallthru
      _
    // Predicated region
    $region42: #{tpu_custom_call.1} parent=1 // pred_check
      _
    $region43: #{tpu_custom_call.1} parent=1 // pred_check_branch
      %402 = sbr.rel (0) target = $region45
    $region44: #{tpu_custom_call.1} parent=1 // pred_region
      %404 = dma.done [#allocation4], 256
    $region45: #{tpu_custom_call.1} parent=1 // pred_fallthru
      _
    %405 = vsyncpa [#allocation3], 1
    %406 = vsyncpa [#allocation6], 1
    %407 = vsyncpa [#allocation9], 1
    %408 = vsyncpa [#allocation4], 1

</llo_original>
